<compile_context>
chip_gen: v7x
topology: tpu7x:2x2x1
jax: 0.10.0
libtpu: 0.0.40
codegen_flags: <defaults>
</compile_context>

<pallas_src>
import functools

import jax
import jax.numpy as jnp
from jax.experimental import pallas as pl
from jax.experimental.pallas import tpu as pltpu


def _round_up(x, m):
    return (x + m - 1) // m * m


# ---------------------------------------------------------------------------
# Fused Pallas kernel: grid axis = layer index
#   H_{l+1} = BN( A_hat @ (H_l W_l) + b_l ) [+ H_l if residual]
# ---------------------------------------------------------------------------
def fused_gcn_bn_kernel(a_ref, h0_ref, w_ref, b_ref, gamma_ref, beta_ref,
                        last_ref, sum_ref, h_scratch,
                        *, eps: float, residual: bool):
    layer = pl.program_id(0)

    @pl.when(layer == 0)
    def _():
        h_scratch[...] = h0_ref[...].astype(jnp.float32)
        sum_ref[...] = jnp.zeros_like(sum_ref)

    h = h_scratch[...]                                        # (N, Dp) f32

    # JK='sum' in the reference sums h_list[0 .. num_layer-1]; the current h
    # at layer l IS h_list[l], so accumulate BEFORE the update.
    sum_ref[...] = sum_ref[...] + h

    # --- GCNConv: A_hat @ (H W) + b  (bf16 MXU inputs, f32 accumulation) ---
    hw = jnp.dot(h.astype(jnp.bfloat16), w_ref[0],
                 preferred_element_type=jnp.float32)          # (N, Dp)
    agg = jnp.dot(a_ref[...], hw.astype(jnp.bfloat16),
                  preferred_element_type=jnp.float32)         # (N, Dp)
    agg = agg + b_ref[0]

    # --- BatchNorm1d over the node (batch) axis, biased variance ----------
    mean = jnp.mean(agg, axis=0, keepdims=True)               # (1, Dp)
    centered = agg - mean
    var = jnp.mean(centered * centered, axis=0, keepdims=True)
    out = centered * jax.lax.rsqrt(var + eps) * gamma_ref[0] + beta_ref[0]

    # Dropout (eval mode) == identity.
    if residual:
        out = out + h

    h_scratch[...] = out
    last_ref[...] = out.astype(last_ref.dtype)


def fused_global_info(a_hat_bf16, h0, w_stack, b_stack, g_stack, be_stack,
                      *, residual, eps=1e-5):
    num_layer, dp, _ = w_stack.shape
    n = h0.shape[0]

    resident2 = lambda shape: pl.BlockSpec(shape, lambda l: (0, 0))
    per_layer3 = lambda shape: pl.BlockSpec(shape, lambda l: (l, 0, 0))

    # Advisory cost estimate for XLA's scheduler.
    flops = 2 * num_layer * (n * dp * dp + n * n * dp)
    bytes_accessed = (a_hat_bf16.size * 2 + h0.size * 4 + w_stack.size * 2
                      + (b_stack.size + g_stack.size + be_stack.size) * 4
                      + 2 * n * dp * 4)
    transcendentals = num_layer * dp

    # VMEM budget (double-buffer factor on pipelined tensors) + headroom.
    vmem_est = (2 * n * n * 2          # resident A_hat (bf16)
                + 2 * n * dp * 4       # H0
                + 2 * dp * dp * 2      # per-layer W tile
                + 6 * dp * 4           # b / gamma / beta tiles
                + 4 * n * dp * 4       # two resident outputs
                + n * dp * 4           # H scratch
                + 8 * n * dp * 4)      # matmul/BN intermediates
    vmem_limit = int(min(max(vmem_est, 32 * 1024 * 1024), 64 * 1024 * 1024))

    last, total = pl.pallas_call(
        functools.partial(fused_gcn_bn_kernel, eps=eps, residual=residual),
        out_shape=(jax.ShapeDtypeStruct((n, dp), jnp.float32),
                   jax.ShapeDtypeStruct((n, dp), jnp.float32)),
        grid_spec=pltpu.PrefetchScalarGridSpec(
            num_scalar_prefetch=0,
            grid=(num_layer,),
            in_specs=[
                resident2((n, n)),          # A_hat: same block every layer
                resident2((n, dp)),         # H0
                per_layer3((1, dp, dp)),    # W[l]   (bf16)
                per_layer3((1, 1, dp)),     # b[l]
                per_layer3((1, 1, dp)),     # gamma[l]
                per_layer3((1, 1, dp)),     # beta[l]
            ],
            out_specs=(resident2((n, dp)), resident2((n, dp))),
            scratch_shapes=[pltpu.VMEM((n, dp), jnp.float32)],
        ),
        compiler_params=pltpu.CompilerParams(
            dimension_semantics=("arbitrary",),   # sequential layer dependency
            vmem_limit_bytes=vmem_limit),
        cost_estimate=pl.CostEstimate(
            flops=flops, transcendentals=transcendentals,
            bytes_accessed=bytes_accessed),
    )(a_hat_bf16, h0, w_stack, b_stack, g_stack, be_stack)
    return last, total


# ---------------------------------------------------------------------------
# Plain-JAX glue
# ---------------------------------------------------------------------------
def build_normalized_adjacency(edges_index, num_nodes, weight=None):
    """Dense D^{-1/2} A D^{-1/2}, no self loops (PyG gcn_norm, add_self_loops=False)."""
    row = edges_index[0]   # source
    col = edges_index[1]   # target
    if weight is None:
        weight = jnp.ones((edges_index.shape[1],), dtype=jnp.float32)
    # A[target, source] = edge_weight so that out = A @ x aggregates sources.
    a = jnp.zeros((num_nodes, num_nodes), dtype=jnp.float32)
    a = a.at[col, row].add(weight)
    deg = jnp.sum(a, axis=1)
    deg_inv_sqrt = jnp.where(deg > 0, jax.lax.rsqrt(deg), 0.0)
    return deg_inv_sqrt[:, None] * a * deg_inv_sqrt[None, :]


def global_info_generate_forward(embedding_weight, edges_index, params,
                                 *, num_layer, residual=False, jk="last",
                                 weight=None, eps=1e-5):
    """Mirrors GlobalInfoGenerate.forward (eval-mode dropout, batch-stat BN)."""
    n, d = embedding_weight.shape
    dp = _round_up(max(d, 128), 128)      # lane-dense feature axis
    pad_d = dp - d

    a_hat = build_normalized_adjacency(edges_index, n, weight).astype(jnp.bfloat16)

    h0 = jnp.pad(embedding_weight.astype(jnp.float32), ((0, 0), (0, pad_d)))
    w_stack = jnp.stack(
        [jnp.pad(p["w"], ((0, pad_d), (0, pad_d))) for p in params]
    ).astype(jnp.bfloat16)                                        # (L, Dp, Dp)
    b_stack = jnp.stack(
        [jnp.pad(p["b"].reshape(1, d), ((0, 0), (0, pad_d))) for p in params]
    ).astype(jnp.float32)                                         # (L, 1, Dp)
    g_stack = jnp.stack(
        [jnp.pad(p["gamma"].reshape(1, d), ((0, 0), (0, pad_d))) for p in params]
    ).astype(jnp.float32)
    be_stack = jnp.stack(
        [jnp.pad(p["beta"].reshape(1, d), ((0, 0), (0, pad_d))) for p in params]
    ).astype(jnp.float32)

    last, total = fused_global_info(a_hat, h0, w_stack, b_stack, g_stack,
                                    be_stack, residual=residual, eps=eps)

    if jk == "last":
        out = last
    elif jk == "sum":
        out = total
    else:
        raise ValueError(f"unknown JK {jk}")
    return out[:, :d]


# ---------------------------------------------------------------------------
# Deterministic parameter init + example run
# ---------------------------------------------------------------------------
def init_params(key, num_layer, emb_dim):
    params = []
    for _ in range(num_layer):
        key, kw = jax.random.split(key)
        limit = jnp.sqrt(6.0 / (emb_dim + emb_dim))
        w = jax.random.uniform(kw, (emb_dim, emb_dim),
                               minval=-limit, maxval=limit, dtype=jnp.float32)
        b = jnp.zeros((1, emb_dim), dtype=jnp.float32)
        gamma = jnp.ones((1, emb_dim), dtype=jnp.float32)
        beta = jnp.zeros((1, emb_dim), dtype=jnp.float32)
        params.append({"w": w, "b": b, "gamma": gamma, "beta": beta})
    return params


if __name__ == "__main__":
    num_nodes = 64     # number of items in the input embedding layer
    emb_dim = 32
    num_layer = 2
    num_edges = 256

    key = jax.random.PRNGKey(0)
    k_emb, k_edge, k_par = jax.random.split(key, 3)

    # nn.Embedding(num_nodes, emb_dim).weight
    embedding_weight = jax.random.normal(k_emb, (num_nodes, emb_dim),
                                         dtype=jnp.float32)
    # edges_index: (2, E) int32
    edges_index = jax.random.randint(k_edge, (2, num_edges), 0, num_nodes,
                                     dtype=jnp.int32)
    params = init_params(k_par, num_layer, emb_dim)

    out = global_info_generate_forward(embedding_weight, edges_index, params,
                                       num_layer=num_layer,
                                       residual=False, jk="last")
    out = jax.block_until_ready(out)
    assert out.shape == (num_nodes, emb_dim)
    assert bool(jnp.all(jnp.isfinite(out)))
    print("KERNEL_OK")
</pallas_src>

<mosaic_0001>
module attributes {stable_mosaic.version = 11 : i64} {
  func.func @fused_gcn_bn_kernel(%arg0: i32, %arg1: memref<64x64xbf16, #tpu.memory_space<vmem>>, %arg2: memref<64x128xf32, #tpu.memory_space<vmem>>, %arg3: memref<1x128x128xbf16, #tpu.memory_space<vmem>>, %arg4: memref<1x1x128xf32, #tpu.memory_space<vmem>>, %arg5: memref<1x1x128xf32, #tpu.memory_space<vmem>>, %arg6: memref<1x1x128xf32, #tpu.memory_space<vmem>>, %arg7: memref<64x128xf32, #tpu.memory_space<vmem>>, %arg8: memref<64x128xf32, #tpu.memory_space<vmem>>, %arg9: memref<64x128xf32, #tpu.memory_space<vmem>>) attributes {dimension_semantics = [#tpu.dimension_semantics<arbitrary>], iteration_bounds = array<i64: 2>, scalar_prefetch = 0 : i64, scratch_operands = 1 : i64, tpu.core_type = #tpu.core_type<tc>, window_params = [{pipeline_mode = #tpu.pipeline_mode<synchronous>, transform_indices = @transform_0, window_bounds = array<i64: 64, 64>}, {pipeline_mode = #tpu.pipeline_mode<synchronous>, transform_indices = @transform_1, window_bounds = array<i64: 64, 128>}, {transform_indices = @transform_2, window_bounds = array<i64: 1, 128, 128>}, {transform_indices = @transform_3, window_bounds = array<i64: 1, 1, 128>}, {transform_indices = @transform_4, window_bounds = array<i64: 1, 1, 128>}, {transform_indices = @transform_5, window_bounds = array<i64: 1, 1, 128>}, {pipeline_mode = #tpu.pipeline_mode<synchronous>, transform_indices = @transform_6, window_bounds = array<i64: 64, 128>}, {pipeline_mode = #tpu.pipeline_mode<synchronous>, transform_indices = @transform_7, window_bounds = array<i64: 64, 128>}]} {
    %c0_i32 = arith.constant 0 : i32
    %0 = arith.cmpi eq, %arg0, %c0_i32 : i32
    %1 = arith.extui %0 : i1 to i32
    %c0_i32_0 = arith.constant 0 : i32
    %2 = arith.cmpi ne, %1, %c0_i32_0 : i32
    scf.if %2 {
      %c0_30 = arith.constant 0 : index
      %c0_31 = arith.constant 0 : index
      %44 = vector.load %arg2[%c0_30, %c0_31] : memref<64x128xf32, #tpu.memory_space<vmem>>, vector<64x128xf32>
      %c0_32 = arith.constant 0 : index
      %c0_33 = arith.constant 0 : index
      %45 = vector.load %arg9[%c0_32, %c0_33] : memref<64x128xf32, #tpu.memory_space<vmem>>, vector<64x128xf32>
      tpu.vector_store %arg9[%c0_32, %c0_33], %44 {strides = array<i32>} : memref<64x128xf32, #tpu.memory_space<vmem>>, vector<64x128xf32>,
      %cst_34 = arith.constant 0.000000e+00 : f32
      %46 = vector.broadcast %cst_34 : f32 to vector<64x128xf32>
      %c0_35 = arith.constant 0 : index
      %c0_36 = arith.constant 0 : index
      %47 = vector.load %arg8[%c0_35, %c0_36] : memref<64x128xf32, #tpu.memory_space<vmem>>, vector<64x128xf32>
      tpu.vector_store %arg8[%c0_35, %c0_36], %46 {strides = array<i32>} : memref<64x128xf32, #tpu.memory_space<vmem>>, vector<64x128xf32>,
    } else {
    }
    %c0 = arith.constant 0 : index
    %c0_1 = arith.constant 0 : index
    %3 = vector.load %arg9[%c0, %c0_1] : memref<64x128xf32, #tpu.memory_space<vmem>>, vector<64x128xf32>
    %c0_2 = arith.constant 0 : index
    %c0_3 = arith.constant 0 : index
    %4 = vector.load %arg8[%c0_2, %c0_3] : memref<64x128xf32, #tpu.memory_space<vmem>>, vector<64x128xf32>
    %5 = arith.addf %4, %3 : vector<64x128xf32>
    %c0_4 = arith.constant 0 : index
    %c0_5 = arith.constant 0 : index
    %6 = vector.load %arg8[%c0_4, %c0_5] : memref<64x128xf32, #tpu.memory_space<vmem>>, vector<64x128xf32>
    tpu.vector_store %arg8[%c0_4, %c0_5], %5 {strides = array<i32>} : memref<64x128xf32, #tpu.memory_space<vmem>>, vector<64x128xf32>,
    %7 = arith.truncf %3 : vector<64x128xf32> to vector<64x128xbf16>
    %c0_6 = arith.constant 0 : index
    %c0_7 = arith.constant 0 : index
    %c0_8 = arith.constant 0 : index
    %8 = vector.load %arg3[%c0_6, %c0_7, %c0_8] : memref<1x128x128xbf16, #tpu.memory_space<vmem>>, vector<1x128x128xbf16>
    %9 = vector.shape_cast %8 : vector<1x128x128xbf16> to vector<128x128xbf16>
    %cst = arith.constant dense<0.000000e+00> : vector<64x128xf32>
    %10 = tpu.matmul %7, %9, %cst {dimension_numbers = #tpu.dot_dimension_numbers<[1], [0], [0], [1], [0, 0, 1, 1], [], []>} : vector<64x128xbf16>, vector<128x128xbf16>, vector<64x128xf32> -> vector<64x128xf32>
    %c0_9 = arith.constant 0 : index
    %c0_10 = arith.constant 0 : index
    %11 = vector.load %arg1[%c0_9, %c0_10] : memref<64x64xbf16, #tpu.memory_space<vmem>>, vector<64x64xbf16>
    %12 = arith.truncf %10 : vector<64x128xf32> to vector<64x128xbf16>
    %cst_11 = arith.constant dense<0.000000e+00> : vector<64x128xf32>
    %13 = tpu.matmul %11, %12, %cst_11 {dimension_numbers = #tpu.dot_dimension_numbers<[1], [0], [0], [1], [0, 0, 1, 1], [], []>} : vector<64x64xbf16>, vector<64x128xbf16>, vector<64x128xf32> -> vector<64x128xf32>
    %c0_12 = arith.constant 0 : index
    %c0_13 = arith.constant 0 : index
    %c0_14 = arith.constant 0 : index
    %14 = vector.load %arg4[%c0_12, %c0_13, %c0_14] : memref<1x1x128xf32, #tpu.memory_space<vmem>>, vector<1x1x128xf32>
    %15 = vector.shape_cast %14 : vector<1x1x128xf32> to vector<1x128xf32>
    %16 = vector.broadcast %15 : vector<1x128xf32> to vector<64x128xf32>
    %17 = arith.addf %13, %16 : vector<64x128xf32>
    %cst_15 = arith.constant dense<0.000000e+00> : vector<128xf32>
    %18 = vector.multi_reduction <add>, %17, %cst_15 [0] : vector<64x128xf32> to vector<128xf32>
    %19 = vector.shape_cast %18 : vector<128xf32> to vector<1x128xf32>
    %cst_16 = arith.constant 6.400000e+01 : f32
    %20 = vector.broadcast %cst_16 : f32 to vector<1x128xf32>
    %21 = arith.divf %19, %20 : vector<1x128xf32>
    %22 = vector.broadcast %21 : vector<1x128xf32> to vector<64x128xf32>
    %23 = arith.subf %17, %22 : vector<64x128xf32>
    %24 = arith.mulf %23, %23 : vector<64x128xf32>
    %cst_17 = arith.constant dense<0.000000e+00> : vector<128xf32>
    %25 = vector.multi_reduction <add>, %24, %cst_17 [0] : vector<64x128xf32> to vector<128xf32>
    %26 = vector.shape_cast %25 : vector<128xf32> to vector<1x128xf32>
    %cst_18 = arith.constant 6.400000e+01 : f32
    %27 = vector.broadcast %cst_18 : f32 to vector<1x128xf32>
    %28 = arith.divf %26, %27 : vector<1x128xf32>
    %cst_19 = arith.constant 9.99999974E-6 : f32
    %29 = vector.broadcast %cst_19 : f32 to vector<1x128xf32>
    %30 = arith.addf %28, %29 : vector<1x128xf32>
    %31 = math.rsqrt %30 : vector<1x128xf32>
    %32 = vector.broadcast %31 : vector<1x128xf32> to vector<64x128xf32>
    %33 = arith.mulf %23, %32 : vector<64x128xf32>
    %c0_20 = arith.constant 0 : index
    %c0_21 = arith.constant 0 : index
    %c0_22 = arith.constant 0 : index
    %34 = vector.load %arg5[%c0_20, %c0_21, %c0_22] : memref<1x1x128xf32, #tpu.memory_space<vmem>>, vector<1x1x128xf32>
    %35 = vector.shape_cast %34 : vector<1x1x128xf32> to vector<1x128xf32>
    %36 = vector.broadcast %35 : vector<1x128xf32> to vector<64x128xf32>
    %37 = arith.mulf %33, %36 : vector<64x128xf32>
    %c0_23 = arith.constant 0 : index
    %c0_24 = arith.constant 0 : index
    %c0_25 = arith.constant 0 : index
    %38 = vector.load %arg6[%c0_23, %c0_24, %c0_25] : memref<1x1x128xf32, #tpu.memory_space<vmem>>, vector<1x1x128xf32>
    %39 = vector.shape_cast %38 : vector<1x1x128xf32> to vector<1x128xf32>
    %40 = vector.broadcast %39 : vector<1x128xf32> to vector<64x128xf32>
    %41 = arith.addf %37, %40 : vector<64x128xf32>
    %c0_26 = arith.constant 0 : index
    %c0_27 = arith.constant 0 : index
    %42 = vector.load %arg9[%c0_26, %c0_27] : memref<64x128xf32, #tpu.memory_space<vmem>>, vector<64x128xf32>
    tpu.vector_store %arg9[%c0_26, %c0_27], %41 {strides = array<i32>} : memref<64x128xf32, #tpu.memory_space<vmem>>, vector<64x128xf32>,
    %c0_28 = arith.constant 0 : index
    %c0_29 = arith.constant 0 : index
    %43 = vector.load %arg7[%c0_28, %c0_29] : memref<64x128xf32, #tpu.memory_space<vmem>>, vector<64x128xf32>
    tpu.vector_store %arg7[%c0_28, %c0_29], %41 {strides = array<i32>} : memref<64x128xf32, #tpu.memory_space<vmem>>, vector<64x128xf32>,
    return
  }
  func.func @transform_0(%arg0: i32) -> (i32, i32) {
    %c0_i32 = arith.constant 0 : i32
    %c0_i32_0 = arith.constant 0 : i32
    %c0_i32_1 = arith.constant 0 : i32
    return %c0_i32, %c0_i32_0 : i32, i32
  }
  func.func @transform_1(%arg0: i32) -> (i32, i32) {
    %c0_i32 = arith.constant 0 : i32
    %c0_i32_0 = arith.constant 0 : i32
    %c0_i32_1 = arith.constant 0 : i32
    return %c0_i32, %c0_i32_0 : i32, i32
  }
  func.func @transform_2(%arg0: i32) -> (i32, i32, i32) {
    %c0_i32 = arith.constant 0 : i32
    %c0_i32_0 = arith.constant 0 : i32
    %c0_i32_1 = arith.constant 0 : i32
    return %arg0, %c0_i32, %c0_i32_0 : i32, i32, i32
  }
  func.func @transform_3(%arg0: i32) -> (i32, i32, i32) {
    %c0_i32 = arith.constant 0 : i32
    %c0_i32_0 = arith.constant 0 : i32
    %c0_i32_1 = arith.constant 0 : i32
    return %arg0, %c0_i32, %c0_i32_0 : i32, i32, i32
  }
  func.func @transform_4(%arg0: i32) -> (i32, i32, i32) {
    %c0_i32 = arith.constant 0 : i32
    %c0_i32_0 = arith.constant 0 : i32
    %c0_i32_1 = arith.constant 0 : i32
    return %arg0, %c0_i32, %c0_i32_0 : i32, i32, i32
  }
  func.func @transform_5(%arg0: i32) -> (i32, i32, i32) {
    %c0_i32 = arith.constant 0 : i32
    %c0_i32_0 = arith.constant 0 : i32
    %c0_i32_1 = arith.constant 0 : i32
    return %arg0, %c0_i32, %c0_i32_0 : i32, i32, i32
  }
  func.func @transform_6(%arg0: i32) -> (i32, i32) {
    %c0_i32 = arith.constant 0 : i32
    %c0_i32_0 = arith.constant 0 : i32
    %c0_i32_1 = arith.constant 0 : i32
    return %c0_i32, %c0_i32_0 : i32, i32
  }
  func.func @transform_7(%arg0: i32) -> (i32, i32) {
    %c0_i32 = arith.constant 0 : i32
    %c0_i32_0 = arith.constant 0 : i32
    %c0_i32_1 = arith.constant 0 : i32
    return %c0_i32, %c0_i32_0 : i32, i32
  }
}

</mosaic_0001>

<llo_original>
// kernel: tpu_custom_call.1
$region0: #{tpu_custom_call.1}
  #allocation0 [shape = 'u32[]', space=smem, size = 0x4, offset = 0x4, fixed_abs, tag = 'smem constant byte address 0x4 - core index']
  #allocation1 [shape = 'u32[144,128]{1,0:T(1,128)}', space=vmem, size = 0x12000, scoped, tag = 'internal scratch']
  #allocation2 [shape = 'f32[64,128]{1,0:T(8,128)}', space=vmem, size = 0x8000, scoped, tag = 'scratch operand']
  %s0 = inlined_call_operand.hbm [shape: bf16[64,64], index: 0, kind: input, shape index: {}]
  %s1 = inlined_call_operand.hbm [shape: f32[64,128], index: 1, kind: input, shape index: {}]
  %s2 = inlined_call_operand.hbm [shape: bf16[2,128,128], index: 2, kind: input, shape index: {}]
  %s3 = inlined_call_operand.vmem [shape: f32[2,1,128], index: 3, kind: input, shape index: {}]
  %s4 = inlined_call_operand.vmem [shape: f32[2,1,128], index: 4, kind: input, shape index: {}]
  %s5 = inlined_call_operand.vmem [shape: f32[2,1,128], index: 5, kind: input, shape index: {}]
  %s6 = inlined_call_operand.hbm [shape: f32[64,128], index: 6, kind: output, shape index: {0}]
  %s7 = inlined_call_operand.hbm [shape: f32[64,128], index: 7, kind: output, shape index: {1}]
  %8 = xla_tuple %s6, %s7
  %s9 = sld [smem:[#allocation0]]
  $region81: #{tpu_custom_call.1} parent=0
    _
  %s11 = ssub.s32 1, %s9
  %s12 = scalar_select 0, %s11, %s9
  $region1: #{tpu_custom_call.1} parent=0
    #allocation3 [shape = 'u8[16384]{0}', space=vmem, size = 0x4000, scoped, tag = 'input window, operand 0, single buffered']
    #allocation4 [shape = 's32[2]{0}', space=sflag, size = 0x8, scoped, tag = 'scoped memory for tpu_custom_call.1']
    #allocation5 [shape = 's32[2]{0}', space=sflag, size = 0x8, scoped, tag = 'scoped memory for tpu_custom_call.1']
    #allocation6 [shape = 'u8[32768]{0}', space=vmem, size = 0x8000, scoped, tag = 'input window, operand 1, single buffered']
    #allocation7 [shape = 's32[1]{0}', space=sflag, size = 0x4, scoped, tag = 'scoped memory for tpu_custom_call.1']
    #allocation8 [shape = 'u8[65536]{0}', space=vmem, size = 0x10000, scoped, tag = 'input window, operand 2']
    #allocation9 [shape = 'u8[32768]{0}', space=vmem, size = 0x8000, scoped, tag = 'output window, operand 0, single buffered']
    #allocation10 [shape = 'u8[32768]{0}', space=vmem, size = 0x8000, scoped, tag = 'output window, operand 1, single buffered']
    #allocation11 [shape = 's32[1]{0}', space=sflag, size = 0x4, scoped, tag = 'scoped memory for tpu_custom_call.1']
    %13 = vsyncpa [#allocation4], 0
    %14 = vsyncpa [#allocation7], 0
    %15 = vsyncpa [#allocation5], 0
    %16 = vsyncpa [#allocation11], 0
    loop: start=0, step=1, limit=4
    $region2: #{tpu_custom_call.1} parent=1 // loop_pre_header
      _
    $region3: #{tpu_custom_call.1} parent=1 // loop_header
      %s18 = sphi 0, %s22
      %p19 = scmp.ge.s32.totalorder %s18, 4
      %s26 = sphi 0, %s26
      %s28 = sphi 0, %s26
      %s29 = sphi 0, %s28
      %s43 = sphi 0, %s29
      %s47 = sphi 0, %s47
      %s49 = sphi 0, %s47
      %s50 = sphi 0, %s49
      %s64 = sphi 0, %s50
      %s70 = sphi 0, %s72
      %s73 = sphi 0, %s70
      %s74 = sphi 0, %s73
      %s90 = sphi 0, %s74
      %s96 = sphi 0, %s98
      %s99 = sphi 0, %s96
      %s100 = sphi 0, %s99
      %s116 = sphi 0, %s100
      %s122 = sphi 0, %s124
      %s125 = sphi 0, %s122
      %s126 = sphi 0, %s125
      %s142 = sphi 0, %s126
      %s148 = sphi 0, %s150
      %s151 = sphi 0, %s148
      %s152 = sphi 0, %s151
      %s168 = sphi 0, %s152
      %s172 = sphi 0, %s172
      %s174 = sphi 0, %s172
      %s175 = sphi 0, %s174
      %s189 = sphi 0, %s175
      %s193 = sphi 0, %s193
      %s195 = sphi 0, %s193
      %s196 = sphi 0, %s195
      %s210 = sphi 0, %s196
    $region4: #{tpu_custom_call.1} parent=1 // loop_header_branch
      %21 = sbr.rel (%p19) target = $region8
    $region5: #{tpu_custom_call.1} parent=1 // loop_body
      %s23 = ssub.s32 %s18, 1
      %s24 = ssub.s32 %s18, 2
      %s25 = sadd.s32 %s18, 1
      %s27 = sadd.s32 %s26, 1
      %p30 = scmp.eq.s32.totalorder %s18, 1
      %p31 = scmp.ne.s32.totalorder %s26, %s28
      %p32 = scmp.eq.s32.totalorder %s18, 0
      %p33 = por %p31, %p32
      %p34 = scmp.ne.s32.totalorder %s26, %s28
      %p35 = scmp.eq.s32.totalorder %s23, 1
      %p36 = por %p34, %p35
      %p37 = scmp.ne.s32.totalorder %s28, %s29
      %p38 = scmp.eq.s32.totalorder %s23, 0
      %p39 = por %p37, %p38
      %p40 = scmp.ne.s32.totalorder %s28, %s29
      %p41 = scmp.eq.s32.totalorder %s24, 1
      %p42 = por %p40, %p41
      %p44 = scmp.ne.s32.totalorder %s29, %s43
      %p45 = scmp.eq.s32.totalorder %s24, 0
      %p46 = por %p44, %p45
      %s48 = sadd.s32 %s47, 1
      %p51 = scmp.eq.s32.totalorder %s18, 1
      %p52 = scmp.ne.s32.totalorder %s47, %s49
      %p53 = scmp.eq.s32.totalorder %s18, 0
      %p54 = por %p52, %p53
      %p55 = scmp.ne.s32.totalorder %s47, %s49
      %p56 = scmp.eq.s32.totalorder %s23, 1
      %p57 = por %p55, %p56
      %p58 = scmp.ne.s32.totalorder %s49, %s50
      %p59 = scmp.eq.s32.totalorder %s23, 0
      %p60 = por %p58, %p59
      %p61 = scmp.ne.s32.totalorder %s49, %s50
      %p62 = scmp.eq.s32.totalorder %s24, 1
      %p63 = por %p61, %p62
      %p65 = scmp.ne.s32.totalorder %s50, %s64
      %p66 = scmp.eq.s32.totalorder %s24, 0
      %p67 = por %p65, %p66
      %s68 = ssub.s32 %s18, %s25
      %p69 = scmp.eq.s32.totalorder %s68, 0
      %s71 = sadd.s32 %s70, 1
      %s72 = scalar_select %p69, %s70, %s71
      %p75 = pneg %p69
      %p76 = scmp.eq.s32.totalorder %s18, 1
      %p77 = por %p75, %p76
      %p78 = scmp.ne.s32.totalorder %s70, %s73
      %p79 = scmp.eq.s32.totalorder %s18, 0
      %p80 = por %p78, %p79
      %p81 = scmp.ne.s32.totalorder %s70, %s73
      %p82 = scmp.eq.s32.totalorder %s23, 1
      %p83 = por %p81, %p82
      %p84 = scmp.ne.s32.totalorder %s73, %s74
      %p85 = scmp.eq.s32.totalorder %s23, 0
      %p86 = por %p84, %p85
      %p87 = scmp.ne.s32.totalorder %s73, %s74
      %p88 = scmp.eq.s32.totalorder %s24, 1
      %p89 = por %p87, %p88
      %p91 = scmp.ne.s32.totalorder %s74, %s90
      %p92 = scmp.eq.s32.totalorder %s24, 0
      %p93 = por %p91, %p92
      %s94 = ssub.s32 %s18, %s25
      %p95 = scmp.eq.s32.totalorder %s94, 0
      %s97 = sadd.s32 %s96, 1
      %s98 = scalar_select %p95, %s96, %s97
      %p101 = pneg %p95
      %p102 = scmp.eq.s32.totalorder %s18, 1
      %p103 = por %p101, %p102
      %p104 = scmp.ne.s32.totalorder %s96, %s99
      %p105 = scmp.eq.s32.totalorder %s18, 0
      %p106 = por %p104, %p105
      %p107 = scmp.ne.s32.totalorder %s96, %s99
      %p108 = scmp.eq.s32.totalorder %s23, 1
      %p109 = por %p107, %p108
      %p110 = scmp.ne.s32.totalorder %s99, %s100
      %p111 = scmp.eq.s32.totalorder %s23, 0
      %p112 = por %p110, %p111
      %p113 = scmp.ne.s32.totalorder %s99, %s100
      %p114 = scmp.eq.s32.totalorder %s24, 1
      %p115 = por %p113, %p114
      %p117 = scmp.ne.s32.totalorder %s100, %s116
      %p118 = scmp.eq.s32.totalorder %s24, 0
      %p119 = por %p117, %p118
      %s120 = ssub.s32 %s18, %s25
      %p121 = scmp.eq.s32.totalorder %s120, 0
      %s123 = sadd.s32 %s122, 1
      %s124 = scalar_select %p121, %s122, %s123
      %p127 = pneg %p121
      %p128 = scmp.eq.s32.totalorder %s18, 1
      %p129 = por %p127, %p128
      %p130 = scmp.ne.s32.totalorder %s122, %s125
      %p131 = scmp.eq.s32.totalorder %s18, 0
      %p132 = por %p130, %p131
      %p133 = scmp.ne.s32.totalorder %s122, %s125
      %p134 = scmp.eq.s32.totalorder %s23, 1
      %p135 = por %p133, %p134
      %p136 = scmp.ne.s32.totalorder %s125, %s126
      %p137 = scmp.eq.s32.totalorder %s23, 0
      %p138 = por %p136, %p137
      %p139 = scmp.ne.s32.totalorder %s125, %s126
      %p140 = scmp.eq.s32.totalorder %s24, 1
      %p141 = por %p139, %p140
      %p143 = scmp.ne.s32.totalorder %s126, %s142
      %p144 = scmp.eq.s32.totalorder %s24, 0
      %p145 = por %p143, %p144
      %s146 = ssub.s32 %s18, %s25
      %p147 = scmp.eq.s32.totalorder %s146, 0
      %s149 = sadd.s32 %s148, 1
      %s150 = scalar_select %p147, %s148, %s149
      %p153 = pneg %p147
      %p154 = scmp.eq.s32.totalorder %s18, 1
      %p155 = por %p153, %p154
      %p156 = scmp.ne.s32.totalorder %s148, %s151
      %p157 = scmp.eq.s32.totalorder %s18, 0
      %p158 = por %p156, %p157
      %p159 = scmp.ne.s32.totalorder %s148, %s151
      %p160 = scmp.eq.s32.totalorder %s23, 1
      %p161 = por %p159, %p160
      %p162 = scmp.ne.s32.totalorder %s151, %s152
      %p163 = scmp.eq.s32.totalorder %s23, 0
      %p164 = por %p162, %p163
      %p165 = scmp.ne.s32.totalorder %s151, %s152
      %p166 = scmp.eq.s32.totalorder %s24, 1
      %p167 = por %p165, %p166
      %p169 = scmp.ne.s32.totalorder %s152, %s168
      %p170 = scmp.eq.s32.totalorder %s24, 0
      %p171 = por %p169, %p170
      %s173 = sadd.s32 %s172, 1
      %p176 = scmp.eq.s32.totalorder %s18, 1
      %p177 = scmp.ne.s32.totalorder %s172, %s174
      %p178 = scmp.eq.s32.totalorder %s18, 0
      %p179 = por %p177, %p178
      %p180 = scmp.ne.s32.totalorder %s172, %s174
      %p181 = scmp.eq.s32.totalorder %s23, 1
      %p182 = por %p180, %p181
      %p183 = scmp.ne.s32.totalorder %s174, %s175
      %p184 = scmp.eq.s32.totalorder %s23, 0
      %p185 = por %p183, %p184
      %p186 = scmp.ne.s32.totalorder %s174, %s175
      %p187 = scmp.eq.s32.totalorder %s24, 1
      %p188 = por %p186, %p187
      %p190 = scmp.ne.s32.totalorder %s175, %s189
      %p191 = scmp.eq.s32.totalorder %s24, 0
      %p192 = por %p190, %p191
      %s194 = sadd.s32 %s193, 1
      %p197 = scmp.eq.s32.totalorder %s18, 1
      %p198 = scmp.ne.s32.totalorder %s193, %s195
      %p199 = scmp.eq.s32.totalorder %s18, 0
      %p200 = por %p198, %p199
      %p201 = scmp.ne.s32.totalorder %s193, %s195
      %p202 = scmp.eq.s32.totalorder %s23, 1
      %p203 = por %p201, %p202
      %p204 = scmp.ne.s32.totalorder %s195, %s196
      %p205 = scmp.eq.s32.totalorder %s23, 0
      %p206 = por %p204, %p205
      %p207 = scmp.ne.s32.totalorder %s195, %s196
      %p208 = scmp.eq.s32.totalorder %s24, 1
      %p209 = por %p207, %p208
      %p211 = scmp.ne.s32.totalorder %s196, %s210
      %p212 = scmp.eq.s32.totalorder %s24, 0
      %p213 = por %p211, %p212
      %p214 = scmp.le.s32.totalorder 1, %s18
      %p215 = scmp.lt.s32.totalorder %s18, 3
      %p216 = pnand %p214, %p215
      %p217 = pneg %p216
      // Predicated region
      $region9: #{tpu_custom_call.1} parent=5 // pred_check
        _
      $region10: #{tpu_custom_call.1} parent=5 // pred_check_branch
        %219 = sbr.rel (%p216) target = $region12
      $region11: #{tpu_custom_call.1} parent=5 // pred_region
        %s220 = ssub.s32 %s18, 1
        // Predicated region
        $region13: #{tpu_custom_call.1} parent=11 // pred_check
          %p221 = pneg %p39
        $region14: #{tpu_custom_call.1} parent=11 // pred_check_branch
          %223 = sbr.rel (%p221) target = $region16
        $region15: #{tpu_custom_call.1} parent=11 // pred_region
          %s225 = ssub.s32 512, 512
          %226 = vsyncadd [#allocation4], %s225
          %s227 = sshll.u32 [#allocation3], 4
          %s228 = int_to_ptr.vmem [resolvable:$true] %s227
          %233 = dma.hbm_to_vmem [thread:$0]  %s0, 512, %s228, [#allocation4], 64, 64, 4
        $region16: #{tpu_custom_call.1} parent=11 // pred_fallthru
          _
        // Predicated region
        $region17: #{tpu_custom_call.1} parent=11 // pred_check
          %p234 = pneg %p60
        $region18: #{tpu_custom_call.1} parent=11 // pred_check_branch
          %236 = sbr.rel (%p234) target = $region20
        $region19: #{tpu_custom_call.1} parent=11 // pred_region
          %s238 = ssub.s32 1024, 1024
          %239 = vsyncadd [#allocation7], %s238
          %s240 = sshll.u32 [#allocation6], 4
          %s241 = int_to_ptr.vmem [resolvable:$true] %s240
          %246 = dma.hbm_to_vmem [thread:$0]  %s1, 1024, %s241, [#allocation7], 128, 128, 8
        $region20: #{tpu_custom_call.1} parent=11 // pred_fallthru
          _
      $region12: #{tpu_custom_call.1} parent=5 // pred_fallthru
        _
      %p247 = scmp.lt.s32.totalorder %s18, 2
      // Predicated region
      $region21: #{tpu_custom_call.1} parent=5 // pred_check
        %p248 = pneg %p247
      $region22: #{tpu_custom_call.1} parent=5 // pred_check_branch
        %250 = sbr.rel (%p248) target = $region24
      $region23: #{tpu_custom_call.1} parent=5 // pred_region
        // Predicated region
        $region25: #{tpu_custom_call.1} parent=23 // pred_check
          %p251 = pneg %p80
        $region26: #{tpu_custom_call.1} parent=23 // pred_check_branch
          %253 = sbr.rel (%p251) target = $region28
        $region27: #{tpu_custom_call.1} parent=23 // pred_region
          %s254 = sand.u32 %s18, 1
          %s255 = scalar_lea.sflag [#allocation4], %s254
          %s256 = sand.u32 %s70, 1
          %s257 = smul.addr %s256, 64
          %s258 = scalar_lea.vmem [#allocation8], %s257
          %s260 = ssub.s32 1024, 1024
          %261 = vsyncadd %s255, %s260
          %s262 = smul.addr %s18, 16
          %s263 = smul.addr %s262, 64
          %s264 = scalar_lea.hbm %s2, %s263
          %s265 = sshll.u32 %s258, 4
          %s266 = int_to_ptr.vmem [resolvable:$true] %s265
          %271 = dma.hbm_to_vmem [thread:$0]  %s264, 1024, %s266, %s255, 64, 64, 4
        $region28: #{tpu_custom_call.1} parent=23 // pred_fallthru
          _
        // Predicated region
        $region29: #{tpu_custom_call.1} parent=23 // pred_check
          %p272 = pneg %p106
        $region30: #{tpu_custom_call.1} parent=23 // pred_check_branch
          %274 = sbr.rel (%p272) target = $region32
        $region31: #{tpu_custom_call.1} parent=23 // pred_region
          %p275 = scmp.lt.s32.totalorder %s18, 1
          %s276 = scalar_select %p275, %s18, 1
          %s277 = scalar_lea.vmem %s3, %s276
        $region32: #{tpu_custom_call.1} parent=23 // pred_fallthru
          _
        // Predicated region
        $region33: #{tpu_custom_call.1} parent=23 // pred_check
          %p278 = pneg %p132
        $region34: #{tpu_custom_call.1} parent=23 // pred_check_branch
          %280 = sbr.rel (%p278) target = $region36
        $region35: #{tpu_custom_call.1} parent=23 // pred_region
          %p281 = scmp.lt.s32.totalorder %s18, 1
          %s282 = scalar_select %p281, %s18, 1
          %s283 = scalar_lea.vmem %s4, %s282
        $region36: #{tpu_custom_call.1} parent=23 // pred_fallthru
          _
        // Predicated region
        $region37: #{tpu_custom_call.1} parent=23 // pred_check
          %p284 = pneg %p158
        $region38: #{tpu_custom_call.1} parent=23 // pred_check_branch
          %286 = sbr.rel (%p284) target = $region40
        $region39: #{tpu_custom_call.1} parent=23 // pred_region
          %p287 = scmp.lt.s32.totalorder %s18, 1
          %s288 = scalar_select %p287, %s18, 1
          %s289 = scalar_lea.vmem %s5, %s288
        $region40: #{tpu_custom_call.1} parent=23 // pred_fallthru
          _
      $region24: #{tpu_custom_call.1} parent=5 // pred_fallthru
        _
      %p290 = scmp.le.s32.totalorder 1, %s18
      %p291 = scmp.lt.s32.totalorder %s18, 3
      %p292 = pnand %p290, %p291
      %p293 = pneg %p292
      // Predicated region
      $region41: #{tpu_custom_call.1} parent=5 // pred_check
        _
      $region42: #{tpu_custom_call.1} parent=5 // pred_check_branch
        %295 = sbr.rel (%p292) target = $region44
      $region43: #{tpu_custom_call.1} parent=5 // pred_region
        %s296 = ssub.s32 %s18, 1
        // Predicated region
        $region45: #{tpu_custom_call.1} parent=43 // pred_check
          %p297 = pneg %p39
        $region46: #{tpu_custom_call.1} parent=43 // pred_check_branch
          %299 = sbr.rel (%p297) target = $region48
        $region47: #{tpu_custom_call.1} parent=43 // pred_region
          %300 = dma.done [#allocation4], 512
        $region48: #{tpu_custom_call.1} parent=43 // pred_fallthru
          _
        // Predicated region
        $region49: #{tpu_custom_call.1} parent=43 // pred_check
          %p301 = pneg %p60
        $region50: #{tpu_custom_call.1} parent=43 // pred_check_branch
          %303 = sbr.rel (%p301) target = $region52
        $region51: #{tpu_custom_call.1} parent=43 // pred_region
          %304 = dma.done [#allocation7], 1024
        $region52: #{tpu_custom_call.1} parent=43 // pred_fallthru
          _
        %s305 = sand.u32 %s23, 1
        %s306 = scalar_lea.sflag [#allocation4], %s305
        %s307 = sand.u32 %s73, 1
        %s308 = smul.addr %s307, 64
        %s309 = scalar_lea.vmem [#allocation8], %s308
        // Predicated region
        $region53: #{tpu_custom_call.1} parent=43 // pred_check
          %p310 = pneg %p86
        $region54: #{tpu_custom_call.1} parent=43 // pred_check_branch
          %312 = sbr.rel (%p310) target = $region56
        $region55: #{tpu_custom_call.1} parent=43 // pred_region
          %313 = dma.done %s306, 1024
        $region56: #{tpu_custom_call.1} parent=43 // pred_fallthru
          _
        %p314 = pneg %p39
        %p315 = pneg %p36
        %p316 = pneg %p60
        %p317 = pneg %p57
        %s318 = sand.u32 %s23, 1
        %s319 = scalar_lea.sflag [#allocation4], %s318
        %s320 = sand.u32 %s73, 1
        %s321 = smul.addr %s320, 64
        %s322 = scalar_lea.vmem [#allocation8], %s321
        %p323 = pneg %p86
        %p324 = pneg %p83
        %p325 = scmp.lt.s32.totalorder %s23, 1
        %s326 = scalar_select %p325, %s23, 1
        %s327 = scalar_lea.vmem %s3, %s326
        %p328 = pneg %p112
        %p329 = pneg %p109
        %p330 = scmp.lt.s32.totalorder %s23, 1
        %s331 = scalar_select %p330, %s23, 1
        %s332 = scalar_lea.vmem %s4, %s331
        %p333 = pneg %p138
        %p334 = pneg %p135
        %p335 = scmp.lt.s32.totalorder %s23, 1
        %s336 = scalar_select %p335, %s23, 1
        %s337 = scalar_lea.vmem %s5, %s336
        %p338 = pneg %p164
        %p339 = pneg %p161
        %p340 = pneg %p185
        %p341 = pneg %p182
        %p342 = pneg %p206
        %p343 = pneg %p203
        %p344 = scmp.lt.s32.totalorder %s23, 1
        %s345 = scalar_select %p344, %s23, 1
        %s346 = scalar_lea.vmem %s3, %s345
        %p347 = scmp.lt.s32.totalorder %s23, 1
        %s348 = scalar_select %p347, %s23, 1
        %s349 = scalar_lea.vmem %s4, %s348
        %p350 = scmp.lt.s32.totalorder %s23, 1
        %s351 = scalar_select %p350, %s23, 1
        %s352 = scalar_lea.vmem %s5, %s351
        %p354 = scmp.eq.s32.totalorder %s23, 0
        // Predicated region
        $region57: #{tpu_custom_call.1} parent=43 // pred_check
          %p355 = pneg %p354
        $region58: #{tpu_custom_call.1} parent=43 // pred_check_branch
          %357 = sbr.rel (%p355) target = $region60
        $region59: #{tpu_custom_call.1} parent=43 // pred_region
          %v358 = vld [vmem:[#allocation6] sm:$0xff]
          %v359 = vld [vmem:[#allocation6 + $0x8] sm:$0xff]
          %v360 = vld [vmem:[#allocation6 + $0x10] sm:$0xff]
          %v361 = vld [vmem:[#allocation6 + $0x18] sm:$0xff]
          %v362 = vld [vmem:[#allocation6 + $0x20] sm:$0xff]
          %v363 = vld [vmem:[#allocation6 + $0x28] sm:$0xff]
          %v364 = vld [vmem:[#allocation6 + $0x30] sm:$0xff]
          %v365 = vld [vmem:[#allocation6 + $0x38] sm:$0xff]
          %366 = vst [vmem:[#allocation2] sm:$0xff] %v358
          %367 = vst [vmem:[#allocation2 + $0x8] sm:$0xff] %v359
          %368 = vst [vmem:[#allocation2 + $0x10] sm:$0xff] %v360
          %369 = vst [vmem:[#allocation2 + $0x18] sm:$0xff] %v361
          %370 = vst [vmem:[#allocation2 + $0x20] sm:$0xff] %v362
          %371 = vst [vmem:[#allocation2 + $0x28] sm:$0xff] %v363
          %372 = vst [vmem:[#allocation2 + $0x30] sm:$0xff] %v364
          %373 = vst [vmem:[#allocation2 + $0x38] sm:$0xff] %v365
          %374 = vst [vmem:[#allocation10] sm:$0xff] 0.0
          %375 = vst [vmem:[#allocation10 + $0x8] sm:$0xff] 0.0
          %376 = vst [vmem:[#allocation10 + $0x10] sm:$0xff] 0.0
          %377 = vst [vmem:[#allocation10 + $0x18] sm:$0xff] 0.0
          %378 = vst [vmem:[#allocation10 + $0x20] sm:$0xff] 0.0
          %379 = vst [vmem:[#allocation10 + $0x28] sm:$0xff] 0.0
          %380 = vst [vmem:[#allocation10 + $0x30] sm:$0xff] 0.0
          %381 = vst [vmem:[#allocation10 + $0x38] sm:$0xff] 0.0
        $region60: #{tpu_custom_call.1} parent=43 // pred_fallthru
          _
        %v382 = vld [vmem:[#allocation2] sm:$0xff]
        %v383 = vld [vmem:[#allocation2 + $0x8] sm:$0xff]
        %v384 = vld [vmem:[#allocation2 + $0x10] sm:$0xff]
        %v385 = vld [vmem:[#allocation2 + $0x18] sm:$0xff]
        %v386 = vld [vmem:[#allocation2 + $0x20] sm:$0xff]
        %v387 = vld [vmem:[#allocation2 + $0x28] sm:$0xff]
        %v388 = vld [vmem:[#allocation2 + $0x30] sm:$0xff]
        %v389 = vld [vmem:[#allocation2 + $0x38] sm:$0xff]
        %v390 = vld [vmem:[#allocation10] sm:$0xff]
        %v391 = vld [vmem:[#allocation10 + $0x8] sm:$0xff]
        %v392 = vld [vmem:[#allocation10 + $0x10] sm:$0xff]
        %v393 = vld [vmem:[#allocation10 + $0x18] sm:$0xff]
        %v394 = vld [vmem:[#allocation10 + $0x20] sm:$0xff]
        %v395 = vld [vmem:[#allocation10 + $0x28] sm:$0xff]
        %v396 = vld [vmem:[#allocation10 + $0x30] sm:$0xff]
        %v397 = vld [vmem:[#allocation10 + $0x38] sm:$0xff]
        %v398 = vadd.f32 %v390, %v382
        %v399 = vadd.f32 %v391, %v383
        %v400 = vadd.f32 %v392, %v384
        %v401 = vadd.f32 %v393, %v385
        %v402 = vadd.f32 %v394, %v386
        %v403 = vadd.f32 %v395, %v387
        %v404 = vadd.f32 %v396, %v388
        %v405 = vadd.f32 %v397, %v389
        %406 = vst [vmem:[#allocation10] sm:$0xff] %v398
        %407 = vst [vmem:[#allocation10 + $0x8] sm:$0xff] %v399
        %408 = vst [vmem:[#allocation10 + $0x10] sm:$0xff] %v400
        %409 = vst [vmem:[#allocation10 + $0x18] sm:$0xff] %v401
        %410 = vst [vmem:[#allocation10 + $0x20] sm:$0xff] %v402
        %411 = vst [vmem:[#allocation10 + $0x28] sm:$0xff] %v403
        %412 = vst [vmem:[#allocation10 + $0x30] sm:$0xff] %v404
        %413 = vst [vmem:[#allocation10 + $0x38] sm:$0xff] %v405
        %v414 = vpack.c.bf16 %v383, %v382
        %v415 = vpack.c.bf16 %v385, %v384
        %v416 = vpack.c.bf16 %v387, %v386
        %v417 = vpack.c.bf16 %v389, %v388
        %v418 = vld [vmem:[%s309] sm:$0xf]
        %v419 = vld [vmem:[%s309 + $0x4] sm:$0xf]
        %v420 = vld [vmem:[%s309 + $0x8] sm:$0xf]
        %v421 = vld [vmem:[%s309 + $0xc] sm:$0xf]
        %v422 = vld [vmem:[%s309 + $0x10] sm:$0xf]
        %v423 = vld [vmem:[%s309 + $0x14] sm:$0xf]
        %v424 = vld [vmem:[%s309 + $0x18] sm:$0xf]
        %v425 = vld [vmem:[%s309 + $0x1c] sm:$0xf]
        %v426 = vld [vmem:[%s309 + $0x20] sm:$0xf]
        %v427 = vld [vmem:[%s309 + $0x24] sm:$0xf]
        %v428 = vld [vmem:[%s309 + $0x28] sm:$0xf]
        %v429 = vld [vmem:[%s309 + $0x2c] sm:$0xf]
        %v430 = vld [vmem:[%s309 + $0x30] sm:$0xf]
        %v431 = vld [vmem:[%s309 + $0x34] sm:$0xf]
        %v432 = vld [vmem:[%s309 + $0x38] sm:$0xf]
        %v433 = vld [vmem:[%s309 + $0x3c] sm:$0xf]
        %v450 = vunpack.c.l.b16 %v418
        %v451 = vunpack.c.l.b16 %v419
        %v452 = vunpack.c.l.b16 %v420
        %v453 = vunpack.c.l.b16 %v421
        %v454 = vunpack.c.l.b16 %v422
        %v455 = vunpack.c.l.b16 %v423
        %v456 = vunpack.c.l.b16 %v424
        %v457 = vunpack.c.l.b16 %v425
        %v458 = vunpack.c.l.b16 %v426
        %v459 = vunpack.c.l.b16 %v427
        %v460 = vunpack.c.l.b16 %v428
        %v461 = vunpack.c.l.b16 %v429
        %v462 = vunpack.c.l.b16 %v430
        %v463 = vunpack.c.l.b16 %v431
        %v464 = vunpack.c.l.b16 %v432
        %v465 = vunpack.c.l.b16 %v433
        %v466 = vpack.c.b16 %v451, %v450
        %v467 = vpack.c.b16 %v453, %v452
        %v468 = vpack.c.b16 %v455, %v454
        %v469 = vpack.c.b16 %v457, %v456
        %v470 = vpack.c.b16 %v459, %v458
        %v471 = vpack.c.b16 %v461, %v460
        %v472 = vpack.c.b16 %v463, %v462
        %v473 = vpack.c.b16 %v465, %v464
        %482 = vmatprep.subr.bf16.mxu0 0
        %483 = vmatpush1.bf16.msra.mxu0 %v466
        %484 = vmatprep.subr.bf16.mxu0 0
        %485 = vmatpush1.bf16.msra.mxu0 %v467
        %486 = vmatprep.subr.bf16.mxu0 0
        %487 = vmatpush1.bf16.msra.mxu0 %v468
        %488 = vmatprep.subr.bf16.mxu0 0
        %489 = vmatpush1.bf16.msra.mxu0 %v469
        %490 = vmatprep.subr.bf16.mxu0 0
        %491 = vmatpush1.bf16.msra.mxu0 %v470
        %492 = vmatprep.subr.bf16.mxu0 0
        %493 = vmatpush1.bf16.msra.mxu0 %v471
        %494 = vmatprep.subr.bf16.mxu0 0
        %495 = vmatpush1.bf16.msra.mxu0 %v472
        %496 = vmatprep.subr.bf16.mxu0 0
        %497 = vmatpush1.bf16.msra.mxu0 %v473
        %498 = vmatprep.subr.bf16.mxu0 0
        %499 = vmatpush1.bf16.msra.mxu0 0
        %500 = vmatprep.subr.bf16.mxu0 0
        %501 = vmatpush1.bf16.msra.mxu0 0
        %502 = vmatprep.subr.bf16.mxu0 0
        %503 = vmatpush1.bf16.msra.mxu0 0
        %504 = vmatprep.subr.bf16.mxu0 0
        %505 = vmatpush1.bf16.msra.mxu0 0
        %506 = vmatprep.subr.bf16.mxu0 0
        %507 = vmatpush1.bf16.msra.mxu0 0
        %508 = vmatprep.subr.bf16.mxu0 0
        %509 = vmatpush1.bf16.msra.mxu0 0
        %510 = vmatprep.subr.bf16.mxu0 0
        %511 = vmatpush1.bf16.msra.mxu0 0
        %512 = vmatprep.subr.bf16.mxu0 0
        %513 = vmatpush1.bf16.msra.mxu0 0
        %514 = vmatprep.mubr.bf16.mxu0 0
        %515 = vmatmul.mubr.bf16.gmra.mrb[0].mxu0 %v414
        %v516 = vpop.f32.mrb[0].mxu0
        %v517 = vadd.f32 0.0, %v516
        %v518 = vpop.f32.mrb[0].mxu0
        %v519 = vpop.f32.mrb[0].mxu0
        %v520 = vadd.f32 0.0, %v519
        %v521 = vpop.f32.mrb[0].mxu0
        %522 = vmatprep.mubr.bf16.mxu0 0
        %523 = vmatmul.mubr.bf16.gmra.mrb[0].mxu0 %v415
        %v524 = vpop.f32.mrb[0].mxu0
        %v525 = vadd.f32 0.0, %v524
        %v526 = vpop.f32.mrb[0].mxu0
        %v527 = vpop.f32.mrb[0].mxu0
        %v528 = vadd.f32 0.0, %v527
        %v529 = vpop.f32.mrb[0].mxu0
        %530 = vmatprep.mubr.bf16.mxu0 0
        %531 = vmatmul.mubr.bf16.gmra.mrb[0].mxu0 %v416
        %v532 = vpop.f32.mrb[0].mxu0
        %v533 = vadd.f32 0.0, %v532
        %v534 = vpop.f32.mrb[0].mxu0
        %v535 = vpop.f32.mrb[0].mxu0
        %v536 = vadd.f32 0.0, %v535
        %v537 = vpop.f32.mrb[0].mxu0
        %538 = vmatprep.mubr.bf16.mxu0 0
        %539 = vmatmul.mubr.bf16.gmra.mrb[0].mxu0 %v417
        %v540 = vpop.f32.mrb[0].mxu0
        %v541 = vadd.f32 0.0, %v540
        %v542 = vpop.f32.mrb[0].mxu0
        %v543 = vpop.f32.mrb[0].mxu0
        %v544 = vadd.f32 0.0, %v543
        %v545 = vpop.f32.mrb[0].mxu0
        %546 = vdwg.mxu0
        %v547 = vld [vmem:[#allocation3] sm:$0xf]
        %v548 = vld [vmem:[#allocation3 + $0x4] sm:$0xf]
        %v549 = vld [vmem:[#allocation3 + $0x8] sm:$0xf]
        %v550 = vld [vmem:[#allocation3 + $0xc] sm:$0xf]
        %v551 = vld [vmem:[#allocation3 + $0x10] sm:$0xf]
        %v552 = vld [vmem:[#allocation3 + $0x14] sm:$0xf]
        %v553 = vld [vmem:[#allocation3 + $0x18] sm:$0xf]
        %v554 = vld [vmem:[#allocation3 + $0x1c] sm:$0xf]
        %v555 = vpack.c.bf16 %v520, %v517
        %v556 = vpack.c.bf16 %v528, %v525
        %v557 = vpack.c.bf16 %v536, %v533
        %v558 = vpack.c.bf16 %v544, %v541
        %v559 = vld [vmem:[%s346] sm:$0x1]
        %v561 = vlaneseq
        %v562 = vshrl.u32 %v561, 7
        %v563 = vsub.s32 0, %v562
        %v564 = vrot.slane %v559, %v563
        %v574 = vunpack.c.l.b16 %v547
        %v575 = vunpack.c.l.b16 %v548
        %v576 = vunpack.c.l.b16 %v549
        %v577 = vunpack.c.l.b16 %v550
        %v578 = vunpack.c.l.b16 %v551
        %v579 = vunpack.c.l.b16 %v552
        %v580 = vunpack.c.l.b16 %v553
        %v581 = vunpack.c.l.b16 %v554
        %v582 = vpack.c.b16 %v575, %v574
        %v583 = vpack.c.b16 %v577, %v576
        %v584 = vpack.c.b16 %v579, %v578
        %v585 = vpack.c.b16 %v581, %v580
        %vm586 = vcmask 523264
        %v588 = vsel %vm586, %v582, 0
        %v591 = vsel %vm586, %v583, 0
        %v594 = vsel %vm586, %v584, 0
        %v597 = vsel %vm586, %v585, 0
        %599 = vmatprep.subr.bf16.mxu0 0
        %600 = vmatpush1.bf16.msra.mxu0 %v555
        %601 = vmatprep.subr.bf16.mxu0 0
        %602 = vmatpush1.bf16.msra.mxu0 %v556
        %603 = vmatprep.subr.bf16.mxu0 0
        %604 = vmatpush1.bf16.msra.mxu0 %v557
        %605 = vmatprep.subr.bf16.mxu0 0
        %606 = vmatpush1.bf16.msra.mxu0 %v558
        %607 = vmatprep.subr.bf16.mxu0 0
        %608 = vmatpush1.bf16.msra.mxu0 0
        %609 = vmatprep.subr.bf16.mxu0 0
        %610 = vmatpush1.bf16.msra.mxu0 0
        %611 = vmatprep.subr.bf16.mxu0 0
        %612 = vmatpush1.bf16.msra.mxu0 0
        %613 = vmatprep.subr.bf16.mxu0 0
        %614 = vmatpush1.bf16.msra.mxu0 0
        %615 = vmatprep.subr.bf16.mxu0 0
        %616 = vmatpush1.bf16.msra.mxu0 0
        %617 = vmatprep.subr.bf16.mxu0 0
        %618 = vmatpush1.bf16.msra.mxu0 0
        %619 = vmatprep.subr.bf16.mxu0 0
        %620 = vmatpush1.bf16.msra.mxu0 0
        %621 = vmatprep.subr.bf16.mxu0 0
        %622 = vmatpush1.bf16.msra.mxu0 0
        %623 = vmatprep.subr.bf16.mxu0 0
        %624 = vmatpush1.bf16.msra.mxu0 0
        %625 = vmatprep.subr.bf16.mxu0 0
        %626 = vmatpush1.bf16.msra.mxu0 0
        %627 = vmatprep.subr.bf16.mxu0 0
        %628 = vmatpush1.bf16.msra.mxu0 0
        %629 = vmatprep.subr.bf16.mxu0 0
        %630 = vmatpush1.bf16.msra.mxu0 0
        %631 = vmatprep.mubr.bf16.mxu0 0
        %632 = vmatmul.mubr.bf16.gmra.mrb[0].mxu0 %v588
        %v633 = vpop.f32.mrb[0].mxu0
        %v634 = vadd.f32 %v564, %v633
        %v635 = vpop.f32.mrb[0].mxu0
        %v636 = vpop.f32.mrb[0].mxu0
        %v637 = vadd.f32 %v564, %v636
        %v638 = vpop.f32.mrb[0].mxu0
        %639 = vmatprep.mubr.bf16.mxu0 0
        %640 = vmatmul.mubr.bf16.gmra.mrb[0].mxu0 %v591
        %v641 = vpop.f32.mrb[0].mxu0
        %v642 = vadd.f32 %v564, %v641
        %v643 = vpop.f32.mrb[0].mxu0
        %v644 = vpop.f32.mrb[0].mxu0
        %v645 = vadd.f32 %v564, %v644
        %v646 = vpop.f32.mrb[0].mxu0
        %647 = vmatprep.mubr.bf16.mxu0 0
        %648 = vmatmul.mubr.bf16.gmra.mrb[0].mxu0 %v594
        %v649 = vpop.f32.mrb[0].mxu0
        %v650 = vadd.f32 %v564, %v649
        %v651 = vpop.f32.mrb[0].mxu0
        %v652 = vpop.f32.mrb[0].mxu0
        %v653 = vadd.f32 %v564, %v652
        %v654 = vpop.f32.mrb[0].mxu0
        %655 = vmatprep.mubr.bf16.mxu0 0
        %656 = vmatmul.mubr.bf16.gmra.mrb[0].mxu0 %v597
        %v657 = vpop.f32.mrb[0].mxu0
        %v658 = vadd.f32 %v564, %v657
        %v659 = vpop.f32.mrb[0].mxu0
        %v660 = vpop.f32.mrb[0].mxu0
        %v661 = vadd.f32 %v564, %v660
        %v662 = vpop.f32.mrb[0].mxu0
        %663 = vdwg.mxu0
        %v664 = vadd.f32 %v634, %v637
        %v665 = vadd.f32 %v664, %v642
        %v666 = vadd.f32 %v665, %v645
        %v667 = vadd.f32 %v666, %v650
        %v668 = vadd.f32 %v667, %v653
        %v669 = vadd.f32 %v668, %v658
        %v670 = vadd.f32 %v669, %v661
        %v671 = vrot.slane %v670, 4
        %v672 = vadd.f32 %v670, %v671
        %v673 = vrot.slane %v672, 2
        %v674 = vadd.f32 %v672, %v673
        %v675 = vrot.slane %v674, 1
        %v676 = vadd.f32 %v674, %v675
        %v677 = vrcp.pop 64.0
        %v678 = vmul.f32 %v676, %v677
        %v679 = vsub.f32 %v634, %v678
        %v680 = vsub.f32 %v637, %v678
        %v681 = vsub.f32 %v642, %v678
        %v682 = vsub.f32 %v645, %v678
        %v683 = vsub.f32 %v650, %v678
        %v684 = vsub.f32 %v653, %v678
        %v685 = vsub.f32 %v658, %v678
        %v686 = vsub.f32 %v661, %v678
        %v687 = vmul.f32 %v679, %v679
        %v688 = vmul.f32 %v680, %v680
        %v689 = vmul.f32 %v681, %v681
        %v690 = vmul.f32 %v682, %v682
        %v691 = vmul.f32 %v683, %v683
        %v692 = vmul.f32 %v684, %v684
        %v693 = vmul.f32 %v685, %v685
        %v694 = vmul.f32 %v686, %v686
        %v695 = vadd.f32 %v687, %v688
        %v696 = vadd.f32 %v695, %v689
        %v697 = vadd.f32 %v696, %v690
        %v698 = vadd.f32 %v697, %v691
        %v699 = vadd.f32 %v698, %v692
        %v700 = vadd.f32 %v699, %v693
        %v701 = vadd.f32 %v700, %v694
        %v702 = vrot.slane %v701, 4
        %v703 = vadd.f32 %v701, %v702
        %v704 = vrot.slane %v703, 2
        %v705 = vadd.f32 %v703, %v704
        %v706 = vrot.slane %v705, 1
        %v707 = vadd.f32 %v705, %v706
        %v708 = vmul.f32 %v707, %v677
        %v709 = vadd.f32 %v708, 1e-05
        %v710 = vrsqrt.pop %v709
        %v711 = vmul.f32 %v679, %v710
        %v712 = vmul.f32 %v680, %v710
        %v713 = vmul.f32 %v681, %v710
        %v714 = vmul.f32 %v682, %v710
        %v715 = vmul.f32 %v683, %v710
        %v716 = vmul.f32 %v684, %v710
        %v717 = vmul.f32 %v685, %v710
        %v718 = vmul.f32 %v686, %v710
        %v719 = vld [vmem:[%s349] sm:$0x1]
        %v721 = vlaneseq
        %v722 = vshrl.u32 %v721, 7
        %v723 = vsub.s32 0, %v722
        %v724 = vrot.slane %v719, %v723
        %v726 = vmul.f32 %v711, %v724
        %v727 = vmul.f32 %v712, %v724
        %v728 = vmul.f32 %v713, %v724
        %v729 = vmul.f32 %v714, %v724
        %v730 = vmul.f32 %v715, %v724
        %v731 = vmul.f32 %v716, %v724
        %v732 = vmul.f32 %v717, %v724
        %v733 = vmul.f32 %v718, %v724
        %v734 = vld [vmem:[%s352] sm:$0x1]
        %v736 = vlaneseq
        %v737 = vshrl.u32 %v736, 7
        %v738 = vsub.s32 0, %v737
        %v739 = vrot.slane %v734, %v738
        %v741 = vadd.f32 %v726, %v739
        %v742 = vadd.f32 %v727, %v739
        %v743 = vadd.f32 %v728, %v739
        %v744 = vadd.f32 %v729, %v739
        %v745 = vadd.f32 %v730, %v739
        %v746 = vadd.f32 %v731, %v739
        %v747 = vadd.f32 %v732, %v739
        %v748 = vadd.f32 %v733, %v739
        %749 = vst [vmem:[#allocation2] sm:$0xff] %v741
        %750 = vst [vmem:[#allocation2 + $0x8] sm:$0xff] %v742
        %751 = vst [vmem:[#allocation2 + $0x10] sm:$0xff] %v743
        %752 = vst [vmem:[#allocation2 + $0x18] sm:$0xff] %v744
        %753 = vst [vmem:[#allocation2 + $0x20] sm:$0xff] %v745
        %754 = vst [vmem:[#allocation2 + $0x28] sm:$0xff] %v746
        %755 = vst [vmem:[#allocation2 + $0x30] sm:$0xff] %v747
        %756 = vst [vmem:[#allocation2 + $0x38] sm:$0xff] %v748
        %757 = vst [vmem:[#allocation9] sm:$0xff] %v741
        %758 = vst [vmem:[#allocation9 + $0x8] sm:$0xff] %v742
        %759 = vst [vmem:[#allocation9 + $0x10] sm:$0xff] %v743
        %760 = vst [vmem:[#allocation9 + $0x18] sm:$0xff] %v744
        %761 = vst [vmem:[#allocation9 + $0x20] sm:$0xff] %v745
        %762 = vst [vmem:[#allocation9 + $0x28] sm:$0xff] %v746
        %763 = vst [vmem:[#allocation9 + $0x30] sm:$0xff] %v747
        %764 = vst [vmem:[#allocation9 + $0x38] sm:$0xff] %v748
        // Predicated region
        $region61: #{tpu_custom_call.1} parent=43 // pred_check
          %p765 = pneg %p182
        $region62: #{tpu_custom_call.1} parent=43 // pred_check_branch
          %767 = sbr.rel (%p765) target = $region64
        $region63: #{tpu_custom_call.1} parent=43 // pred_region
          %s769 = ssub.s32 1024, 1024
          %770 = vsyncadd [#allocation5], %s769
          %s771 = sshll.u32 [#allocation9], 4
          %s772 = int_to_ptr.vmem [resolvable:$true] %s771
          %777 = dma.vmem_to_hbm [thread:$0]  %s772, 1024, %s6, [#allocation5], 128, 128, 8
        $region64: #{tpu_custom_call.1} parent=43 // pred_fallthru
          _
        // Predicated region
        $region65: #{tpu_custom_call.1} parent=43 // pred_check
          %p778 = pneg %p203
        $region66: #{tpu_custom_call.1} parent=43 // pred_check_branch
          %780 = sbr.rel (%p778) target = $region68
        $region67: #{tpu_custom_call.1} parent=43 // pred_region
          %s782 = ssub.s32 1024, 1024
          %783 = vsyncadd [#allocation11], %s782
          %s784 = sshll.u32 [#allocation10], 4
          %s785 = int_to_ptr.vmem [resolvable:$true] %s784
          %790 = dma.vmem_to_hbm [thread:$0]  %s785, 1024, %s7, [#allocation11], 128, 128, 8
        $region68: #{tpu_custom_call.1} parent=43 // pred_fallthru
          _
        // Predicated region
        $region69: #{tpu_custom_call.1} parent=43 // pred_check
          %p791 = pneg %p182
        $region70: #{tpu_custom_call.1} parent=43 // pred_check_branch
          %793 = sbr.rel (%p791) target = $region72
        $region71: #{tpu_custom_call.1} parent=43 // pred_region
          %794 = dma.done [#allocation5], 1024
        $region72: #{tpu_custom_call.1} parent=43 // pred_fallthru
          _
        // Predicated region
        $region73: #{tpu_custom_call.1} parent=43 // pred_check
          %p795 = pneg %p203
        $region74: #{tpu_custom_call.1} parent=43 // pred_check_branch
          %797 = sbr.rel (%p795) target = $region76
        $region75: #{tpu_custom_call.1} parent=43 // pred_region
          %798 = dma.done [#allocation11], 1024
        $region76: #{tpu_custom_call.1} parent=43 // pred_fallthru
          _
      $region44: #{tpu_custom_call.1} parent=5 // pred_fallthru
        _
      %p799 = scmp.le.s32.totalorder 2, %s18
      // Predicated region
      $region77: #{tpu_custom_call.1} parent=5 // pred_check
        %p800 = pneg %p799
      $region78: #{tpu_custom_call.1} parent=5 // pred_check_branch
        %802 = sbr.rel (%p800) target = $region80
      $region79: #{tpu_custom_call.1} parent=5 // pred_region
        %s803 = ssub.s32 %s18, 2
      $region80: #{tpu_custom_call.1} parent=5 // pred_fallthru
        _
    $region6: #{tpu_custom_call.1} parent=1 // loop_footer
      %s22 = sadd.s32 1, %s18
    $region7: #{tpu_custom_call.1} parent=1 // loop_footer_branch
      %17 = sbr.rel target = $region3
    $region8: #{tpu_custom_call.1} parent=1 // loop_exit
      _
    %804 = vsyncpa [#allocation4], 1
    %s805 = scalar_lea.sflag [#allocation4], 1
    %806 = vsyncpa %s805, 1
    %807 = vsyncpa [#allocation7], 1
    %808 = vsyncpa [#allocation5], 1
    %s809 = scalar_lea.sflag [#allocation5], 1
    %810 = vsyncpa %s809, 1
    %811 = vsyncpa [#allocation11], 1

</llo_original>
